<compile_context>
chip_gen: v5e
topology: v5e:2x2
jax: 0.10.0
libtpu: 0.0.40
codegen_flags: <defaults>
</compile_context>

<pallas_src>
import jax
import jax.numpy as jnp
from jax.experimental import pallas as pl
from jax.experimental.pallas import tpu as pltpu


# ----------------------------------------------------------------------------
# One fused kernel per batch tile: embedding gather + both CNN branches +
# global max-pool + fc1 + fc2.
# Refs: x1/x2 (tb, T) int32 token ids; emb (V, E); wc (K*E, 2*F3) = [wc1|wc2];
#       bc (1, 2*F3); w1 (2*F3, H1); b1 (1, H1); w2 (H1, CP) zero-padded;
#       b2 (1, CP); out (tb, CP).
# ----------------------------------------------------------------------------
def ocr_cnn_kernel(x1_ref, x2_ref, emb_ref, wc_ref, bc_ref,
                   w1_ref, b1_ref, w2_ref, b2_ref, out_ref):
    tb, T = x1_ref.shape
    V, E = emb_ref.shape
    KE, F6 = wc_ref.shape
    F3 = F6 // 2                      # filters per branch
    K = KE // E                       # conv kernel size (shared by all layers)
    L = T - K + 1                     # valid-conv output length
    Lp = ((L + 7) // 8) * 8           # sublane-aligned (padded) output length
    Tp = Lp + K - 1                   # time length needed for padded im2col
    N = 2 * tb                        # stacked examples: [branch-a | branch-b]

    # --- in-kernel embedding gather (one-hot @ emb): single MXU pass for both
    #     inputs, no dense-activation HBM traffic ---
    idx = jnp.concatenate([x1_ref[...], x2_ref[...]], axis=0)              # (N, T)
    idx3 = jax.lax.broadcast_in_dim(idx, (N, T, V), (0, 1))
    vio = jax.lax.broadcasted_iota(jnp.int32, (N, T, V), 2)
    onehot = (idx3 == vio).astype(jnp.float32).reshape(N * T, V)
    xe = jnp.dot(onehot, emb_ref[...],
                 preferred_element_type=jnp.float32).reshape(N, T, E)      # (N, T, E)

    # --- batched, sublane-aligned im2col (built once for the whole batch) ---
    if Tp > T:
        xe = jnp.concatenate(
            [xe, jnp.zeros((N, Tp - T, E), jnp.float32)], axis=1)          # (N, Tp, E)
    xcol = jnp.concatenate([xe[:, k:k + Lp, :] for k in range(K)], axis=2)
    xcol = xcol.reshape(N * Lp, KE)                                        # (N*Lp, K*E)

    # --- all conv layers of BOTH branches in one MXU pass ---
    # columns [:F3] = branch-1 filters, [F3:] = branch-2 filters.
    conv = jnp.dot(xcol, wc_ref[...], preferred_element_type=jnp.float32)  # (N*Lp, 2*F3)
    conv = jax.nn.relu(conv + bc_ref[...])
    conv = conv.reshape(N, Lp, F6)
    if Lp > L:
        lio = jax.lax.broadcasted_iota(jnp.int32, (N, Lp, F6), 1)
        conv = jnp.where(lio < L, conv, 0.0)   # padded rows (>=0 max unaffected)
    pooled = jnp.max(conv, axis=1)                                         # (N, 2*F3)

    # rows [:tb] carry branch-1 features in cols [:F3]; rows [tb:] carry
    # branch-2 features in cols [F3:].  Zero the cross terms so a single fc1
    # matmul + adding the two row halves reproduces fc1(concat(a, b)).
    rio = jax.lax.broadcasted_iota(jnp.int32, (N, F6), 0)
    cio = jax.lax.broadcasted_iota(jnp.int32, (N, F6), 1)
    keep = ((rio < tb) & (cio < F3)) | ((rio >= tb) & (cio >= F3))
    feat = jnp.where(keep, pooled, 0.0)
    # (reference's post-pool ReLU is a no-op: pooled >= 0 already)

    part = jnp.dot(feat, w1_ref[...], preferred_element_type=jnp.float32)  # (N, H1)
    h = jax.nn.relu(part[:tb, :] + part[tb:, :] + b1_ref[...])             # (tb, H1)
    out_ref[...] = (jnp.dot(h, w2_ref[...], preferred_element_type=jnp.float32)
                    + b2_ref[...])                                         # (tb, CP)


def ocr_cnn_forward(params, x1, x2):
    emb = params["emb"]
    wc1, bc1 = params["cnn1"]
    wc2, bc2 = params["cnn2"]
    w1, b1, w2, b2 = params["fc"]

    B, T = x1.shape
    V, E = emb.shape
    KE, F3 = wc1.shape
    H1, C = w2.shape
    CP = pl.cdiv(C, 128) * 128                    # lane-dense padded class dim

    # Stack the two branches' conv weights along the filter axis (one MXU pass);
    # pad fc2 to a lane-dense output width (zeros -> sliced off below).
    wc = jnp.concatenate([wc1, wc2], axis=1)      # (K*E, 2*F3)
    bc = jnp.concatenate([bc1, bc2], axis=1)      # (1, 2*F3)
    w2p = jnp.pad(w2, ((0, 0), (0, CP - C)))      # (H1, CP)
    b2p = jnp.pad(b2, ((0, 0), (0, CP - C)))      # (1, CP)

    tb = 8 if (B % 8 == 0) else B                 # sublane-aligned batch tile
    grid = (B // tb,)

    x1 = x1.astype(jnp.int32)
    x2 = x2.astype(jnp.int32)

    res = pl.pallas_call(
        ocr_cnn_kernel,
        out_shape=jax.ShapeDtypeStruct((B, CP), jnp.float32),
        grid=grid,
        in_specs=[
            pl.BlockSpec((tb, T), lambda i: (i, 0)),          # x1 token ids
            pl.BlockSpec((tb, T), lambda i: (i, 0)),          # x2 token ids
            pl.BlockSpec((V, E), lambda i: (0, 0)),           # emb table (resident)
            pl.BlockSpec((KE, 2 * F3), lambda i: (0, 0)),     # stacked conv weights
            pl.BlockSpec((1, 2 * F3), lambda i: (0, 0)),      # stacked conv bias
            pl.BlockSpec((2 * F3, H1), lambda i: (0, 0)),     # fc1 weight
            pl.BlockSpec((1, H1), lambda i: (0, 0)),          # fc1 bias
            pl.BlockSpec((H1, CP), lambda i: (0, 0)),         # fc2 weight (padded)
            pl.BlockSpec((1, CP), lambda i: (0, 0)),          # fc2 bias (padded)
        ],
        out_specs=pl.BlockSpec((tb, CP), lambda i: (i, 0)),
        compiler_params=pltpu.CompilerParams(
            dimension_semantics=("parallel",)),
    )(x1, x2, emb, wc, bc, w1, b1, w2p, b2p)
    return res[:, :C]


ocr_cnn_forward = jax.jit(ocr_cnn_forward)


# ----------------------------------------------------------------------------
# Deterministic synthetic parameters.
# Conv weight layout: (K*E, 3F) with row k*E + e  <->  PyTorch Conv1d weight[f, e, k];
# the three equal-kernel-size conv layers of a branch are stacked along the filter axis.
# nn.Linear weights are stored transposed (in, out) so kernels compute y = x @ W + b.
# ----------------------------------------------------------------------------
def init_params(key, vocab, embed_dim, num_filters, kernel_size, fc_hidden, n_classes):
    F3 = sum(num_filters)
    (k_emb, kc1, kb1, kc2, kb2, kw1, kbw1, kw2, kbw2) = jax.random.split(key, 9)
    emb = (jax.random.normal(k_emb, (vocab, embed_dim)) * 0.1).astype(jnp.float32)
    wc1 = (jax.random.normal(kc1, (kernel_size * embed_dim, F3)) * 0.05).astype(jnp.float32)
    bc1 = (jax.random.normal(kb1, (1, F3)) * 0.05).astype(jnp.float32)
    wc2 = (jax.random.normal(kc2, (kernel_size * embed_dim, F3)) * 0.05).astype(jnp.float32)
    bc2 = (jax.random.normal(kb2, (1, F3)) * 0.05).astype(jnp.float32)
    w1 = (jax.random.normal(kw1, (2 * F3, fc_hidden)) * 0.05).astype(jnp.float32)
    b1 = (jax.random.normal(kbw1, (1, fc_hidden)) * 0.05).astype(jnp.float32)
    w2 = (jax.random.normal(kw2, (fc_hidden, n_classes)) * 0.05).astype(jnp.float32)
    b2 = (jax.random.normal(kbw2, (1, n_classes)) * 0.05).astype(jnp.float32)
    return {"emb": emb, "cnn1": (wc1, bc1), "cnn2": (wc2, bc2), "fc": (w1, b1, w2, b2)}


if __name__ == "__main__":
    B, T = 2, 16
    VOCAB, EMBED = 50, 64
    NUM_FILTERS = [32, 32, 32]        # scaled-down stand-in for [100, 100, 100]
    KERNEL_SIZE = 8                   # all three conv layers use kernel_size=8 (as in spec)
    FC_HIDDEN = 64                    # scaled-down stand-in for 300
    N_CLASSES = 2

    key = jax.random.PRNGKey(0)
    key, kx1, kx2, kp = jax.random.split(key, 4)
    x1 = jax.random.randint(kx1, (B, T), 0, VOCAB, dtype=jnp.int32)
    x2 = jax.random.randint(kx2, (B, T), 0, VOCAB, dtype=jnp.int32)
    params = init_params(kp, VOCAB, EMBED, NUM_FILTERS, KERNEL_SIZE, FC_HIDDEN, N_CLASSES)

    out = ocr_cnn_forward(params, x1, x2)       # (B, N_CLASSES) logits
    jax.block_until_ready(out)
    assert out.shape == (B, N_CLASSES)
    print("KERNEL_OK")
</pallas_src>

<mosaic_0001>
module attributes {stable_mosaic.version = 11 : i64} {
  func.func @ocr_cnn_kernel(%arg0: i32, %arg1: memref<2x16xi32, #tpu.memory_space<vmem>>, %arg2: memref<2x16xi32, #tpu.memory_space<vmem>>, %arg3: memref<50x64xf32, #tpu.memory_space<vmem>>, %arg4: memref<512x192xf32, #tpu.memory_space<vmem>>, %arg5: memref<1x192xf32, #tpu.memory_space<vmem>>, %arg6: memref<192x64xf32, #tpu.memory_space<vmem>>, %arg7: memref<1x64xf32, #tpu.memory_space<vmem>>, %arg8: memref<64x128xf32, #tpu.memory_space<vmem>>, %arg9: memref<1x128xf32, #tpu.memory_space<vmem>>, %arg10: memref<2x128xf32, #tpu.memory_space<vmem>>) attributes {dimension_semantics = [#tpu.dimension_semantics<parallel>], iteration_bounds = array<i64: 1>, scalar_prefetch = 0 : i64, scratch_operands = 0 : i64, tpu.core_type = #tpu.core_type<tc>, window_params = [{transform_indices = @transform_0, window_bounds = array<i64: 2, 16>}, {transform_indices = @transform_1, window_bounds = array<i64: 2, 16>}, {pipeline_mode = #tpu.pipeline_mode<synchronous>, transform_indices = @transform_2, window_bounds = array<i64: 50, 64>}, {pipeline_mode = #tpu.pipeline_mode<synchronous>, transform_indices = @transform_3, window_bounds = array<i64: 512, 192>}, {pipeline_mode = #tpu.pipeline_mode<synchronous>, transform_indices = @transform_4, window_bounds = array<i64: 1, 192>}, {pipeline_mode = #tpu.pipeline_mode<synchronous>, transform_indices = @transform_5, window_bounds = array<i64: 192, 64>}, {pipeline_mode = #tpu.pipeline_mode<synchronous>, transform_indices = @transform_6, window_bounds = array<i64: 1, 64>}, {pipeline_mode = #tpu.pipeline_mode<synchronous>, transform_indices = @transform_7, window_bounds = array<i64: 64, 128>}, {pipeline_mode = #tpu.pipeline_mode<synchronous>, transform_indices = @transform_8, window_bounds = array<i64: 1, 128>}, {transform_indices = @transform_9, window_bounds = array<i64: 2, 128>}]} {
    %c0 = arith.constant 0 : index
    %c0_0 = arith.constant 0 : index
    %0 = vector.load %arg1[%c0, %c0_0] : memref<2x16xi32, #tpu.memory_space<vmem>>, vector<2x16xi32>
    %c0_1 = arith.constant 0 : index
    %c0_2 = arith.constant 0 : index
    %1 = vector.load %arg2[%c0_1, %c0_2] : memref<2x16xi32, #tpu.memory_space<vmem>>, vector<2x16xi32>
    %2 = tpu.concatenate %0, %1 in 0 : vector<2x16xi32>, vector<2x16xi32> -> vector<4x16xi32>
    %3 = vector.shape_cast %2 : vector<4x16xi32> to vector<4x16x1xi32>
    %4 = vector.broadcast %3 : vector<4x16x1xi32> to vector<4x16x50xi32>
    %5 = tpu.iota {dimensions = array<i32: 2>} : vector<4x16x50xi32>
    %6 = arith.cmpi eq, %4, %5 : vector<4x16x50xi32>
    %7 = arith.extui %6 : vector<4x16x50xi1> to vector<4x16x50xi32>
    %8 = arith.sitofp %7 : vector<4x16x50xi32> to vector<4x16x50xf32>
    %9 = vector.shape_cast %8 : vector<4x16x50xf32> to vector<64x50xf32>
    %c0_3 = arith.constant 0 : index
    %c0_4 = arith.constant 0 : index
    %10 = vector.load %arg3[%c0_3, %c0_4] : memref<50x64xf32, #tpu.memory_space<vmem>>, vector<50x64xf32>
    %cst = arith.constant dense<0.000000e+00> : vector<64x64xf32>
    %11 = tpu.matmul %9, %10, %cst {dimension_numbers = #tpu.dot_dimension_numbers<[1], [0], [0], [1], [0, 0, 1, 1], [], []>} : vector<64x50xf32>, vector<50x64xf32>, vector<64x64xf32> -> vector<64x64xf32>
    %12 = vector.shape_cast %11 : vector<64x64xf32> to vector<4x16x64xf32>
    %cst_5 = arith.constant 0.000000e+00 : f32
    %13 = vector.broadcast %cst_5 : f32 to vector<4x7x64xf32>
    %14 = tpu.concatenate %12, %13 in 1 : vector<4x16x64xf32>, vector<4x7x64xf32> -> vector<4x23x64xf32>
    %15 = vector.extract_strided_slice %14 {offsets = [0, 0, 0], sizes = [4, 16, 64], strides = [1, 1, 1]} : vector<4x23x64xf32> to vector<4x16x64xf32>
    %16 = vector.extract_strided_slice %14 {offsets = [0, 1, 0], sizes = [4, 16, 64], strides = [1, 1, 1]} : vector<4x23x64xf32> to vector<4x16x64xf32>
    %17 = vector.extract_strided_slice %14 {offsets = [0, 2, 0], sizes = [4, 16, 64], strides = [1, 1, 1]} : vector<4x23x64xf32> to vector<4x16x64xf32>
    %18 = vector.extract_strided_slice %14 {offsets = [0, 3, 0], sizes = [4, 16, 64], strides = [1, 1, 1]} : vector<4x23x64xf32> to vector<4x16x64xf32>
    %19 = vector.extract_strided_slice %14 {offsets = [0, 4, 0], sizes = [4, 16, 64], strides = [1, 1, 1]} : vector<4x23x64xf32> to vector<4x16x64xf32>
    %20 = vector.extract_strided_slice %14 {offsets = [0, 5, 0], sizes = [4, 16, 64], strides = [1, 1, 1]} : vector<4x23x64xf32> to vector<4x16x64xf32>
    %21 = vector.extract_strided_slice %14 {offsets = [0, 6, 0], sizes = [4, 16, 64], strides = [1, 1, 1]} : vector<4x23x64xf32> to vector<4x16x64xf32>
    %22 = vector.extract_strided_slice %14 {offsets = [0, 7, 0], sizes = [4, 16, 64], strides = [1, 1, 1]} : vector<4x23x64xf32> to vector<4x16x64xf32>
    %23 = tpu.concatenate %15, %16, %17, %18, %19, %20, %21, %22 in 2 : vector<4x16x64xf32>, vector<4x16x64xf32>, vector<4x16x64xf32>, vector<4x16x64xf32>, vector<4x16x64xf32>, vector<4x16x64xf32>, vector<4x16x64xf32>, vector<4x16x64xf32> -> vector<4x16x512xf32>
    %24 = vector.shape_cast %23 : vector<4x16x512xf32> to vector<64x512xf32>
    %c0_6 = arith.constant 0 : index
    %c0_7 = arith.constant 0 : index
    %25 = vector.load %arg4[%c0_6, %c0_7] : memref<512x192xf32, #tpu.memory_space<vmem>>, vector<512x192xf32>
    %cst_8 = arith.constant dense<0.000000e+00> : vector<64x192xf32>
    %26 = tpu.matmul %24, %25, %cst_8 {dimension_numbers = #tpu.dot_dimension_numbers<[1], [0], [0], [1], [0, 0, 1, 1], [], []>} : vector<64x512xf32>, vector<512x192xf32>, vector<64x192xf32> -> vector<64x192xf32>
    %c0_9 = arith.constant 0 : index
    %c0_10 = arith.constant 0 : index
    %27 = vector.load %arg5[%c0_9, %c0_10] : memref<1x192xf32, #tpu.memory_space<vmem>>, vector<1x192xf32>
    %28 = vector.broadcast %27 : vector<1x192xf32> to vector<64x192xf32>
    %29 = arith.addf %26, %28 : vector<64x192xf32>
    %cst_11 = arith.constant 0.000000e+00 : f32
    %30 = vector.broadcast %cst_11 : f32 to vector<64x192xf32>
    %31 = arith.maximumf %29, %30 : vector<64x192xf32>
    %32 = vector.shape_cast %31 : vector<64x192xf32> to vector<4x16x192xf32>
    %33 = tpu.iota {dimensions = array<i32: 1>} : vector<4x16x192xi32>
    %c9_i32 = arith.constant 9 : i32
    %34 = vector.broadcast %c9_i32 : i32 to vector<4x16x192xi32>
    %35 = arith.cmpi slt, %33, %34 : vector<4x16x192xi32>
    %cst_12 = arith.constant 0.000000e+00 : f32
    %36 = vector.broadcast %cst_12 : f32 to vector<4x16x192xf32>
    %37 = arith.select %35, %32, %36 : vector<4x16x192xi1>, vector<4x16x192xf32>
    %cst_13 = arith.constant dense<0xFF800000> : vector<4x192xf32>
    %38 = vector.multi_reduction <maximumf>, %37, %cst_13 [1] : vector<4x16x192xf32> to vector<4x192xf32>
    %39 = tpu.iota {dimensions = array<i32: 0>} : vector<4x192xi32>
    %40 = tpu.iota {dimensions = array<i32: 1>} : vector<4x192xi32>
    %c2_i32 = arith.constant 2 : i32
    %41 = vector.broadcast %c2_i32 : i32 to vector<4x192xi32>
    %42 = arith.cmpi slt, %39, %41 : vector<4x192xi32>
    %c96_i32 = arith.constant 96 : i32
    %43 = vector.broadcast %c96_i32 : i32 to vector<4x192xi32>
    %44 = arith.cmpi slt, %40, %43 : vector<4x192xi32>
    %45 = arith.andi %42, %44 : vector<4x192xi1>
    %c2_i32_14 = arith.constant 2 : i32
    %46 = vector.broadcast %c2_i32_14 : i32 to vector<4x192xi32>
    %47 = arith.cmpi sge, %39, %46 : vector<4x192xi32>
    %c96_i32_15 = arith.constant 96 : i32
    %48 = vector.broadcast %c96_i32_15 : i32 to vector<4x192xi32>
    %49 = arith.cmpi sge, %40, %48 : vector<4x192xi32>
    %50 = arith.andi %47, %49 : vector<4x192xi1>
    %51 = arith.ori %45, %50 : vector<4x192xi1>
    %cst_16 = arith.constant 0.000000e+00 : f32
    %52 = vector.broadcast %cst_16 : f32 to vector<4x192xf32>
    %53 = arith.select %51, %38, %52 : vector<4x192xi1>, vector<4x192xf32>
    %c0_17 = arith.constant 0 : index
    %c0_18 = arith.constant 0 : index
    %54 = vector.load %arg6[%c0_17, %c0_18] : memref<192x64xf32, #tpu.memory_space<vmem>>, vector<192x64xf32>
    %cst_19 = arith.constant dense<0.000000e+00> : vector<4x64xf32>
    %55 = tpu.matmul %53, %54, %cst_19 {dimension_numbers = #tpu.dot_dimension_numbers<[1], [0], [0], [1], [0, 0, 1, 1], [], []>} : vector<4x192xf32>, vector<192x64xf32>, vector<4x64xf32> -> vector<4x64xf32>
    %56 = vector.extract_strided_slice %55 {offsets = [0, 0], sizes = [2, 64], strides = [1, 1]} : vector<4x64xf32> to vector<2x64xf32>
    %57 = vector.extract_strided_slice %55 {offsets = [2, 0], sizes = [2, 64], strides = [1, 1]} : vector<4x64xf32> to vector<2x64xf32>
    %58 = arith.addf %56, %57 : vector<2x64xf32>
    %c0_20 = arith.constant 0 : index
    %c0_21 = arith.constant 0 : index
    %59 = vector.load %arg7[%c0_20, %c0_21] : memref<1x64xf32, #tpu.memory_space<vmem>>, vector<1x64xf32>
    %60 = vector.broadcast %59 : vector<1x64xf32> to vector<2x64xf32>
    %61 = arith.addf %58, %60 : vector<2x64xf32>
    %cst_22 = arith.constant 0.000000e+00 : f32
    %62 = vector.broadcast %cst_22 : f32 to vector<2x64xf32>
    %63 = arith.maximumf %61, %62 : vector<2x64xf32>
    %c0_23 = arith.constant 0 : index
    %c0_24 = arith.constant 0 : index
    %64 = vector.load %arg8[%c0_23, %c0_24] : memref<64x128xf32, #tpu.memory_space<vmem>>, vector<64x128xf32>
    %cst_25 = arith.constant dense<0.000000e+00> : vector<2x128xf32>
    %65 = tpu.matmul %63, %64, %cst_25 {dimension_numbers = #tpu.dot_dimension_numbers<[1], [0], [0], [1], [0, 0, 1, 1], [], []>} : vector<2x64xf32>, vector<64x128xf32>, vector<2x128xf32> -> vector<2x128xf32>
    %c0_26 = arith.constant 0 : index
    %c0_27 = arith.constant 0 : index
    %66 = vector.load %arg9[%c0_26, %c0_27] : memref<1x128xf32, #tpu.memory_space<vmem>>, vector<1x128xf32>
    %67 = vector.broadcast %66 : vector<1x128xf32> to vector<2x128xf32>
    %68 = arith.addf %65, %67 : vector<2x128xf32>
    %c0_28 = arith.constant 0 : index
    %c0_29 = arith.constant 0 : index
    %69 = vector.load %arg10[%c0_28, %c0_29] : memref<2x128xf32, #tpu.memory_space<vmem>>, vector<2x128xf32>
    tpu.vector_store %arg10[%c0_28, %c0_29], %68 {strides = array<i32>} : memref<2x128xf32, #tpu.memory_space<vmem>>, vector<2x128xf32>,
    return
  }
  func.func @transform_0(%arg0: i32) -> (i32, i32) {
    %c0_i32 = arith.constant 0 : i32
    %c0_i32_0 = arith.constant 0 : i32
    return %arg0, %c0_i32 : i32, i32
  }
  func.func @transform_1(%arg0: i32) -> (i32, i32) {
    %c0_i32 = arith.constant 0 : i32
    %c0_i32_0 = arith.constant 0 : i32
    return %arg0, %c0_i32 : i32, i32
  }
  func.func @transform_2(%arg0: i32) -> (i32, i32) {
    %c0_i32 = arith.constant 0 : i32
    %c0_i32_0 = arith.constant 0 : i32
    %c0_i32_1 = arith.constant 0 : i32
    return %c0_i32, %c0_i32_0 : i32, i32
  }
  func.func @transform_3(%arg0: i32) -> (i32, i32) {
    %c0_i32 = arith.constant 0 : i32
    %c0_i32_0 = arith.constant 0 : i32
    %c0_i32_1 = arith.constant 0 : i32
    return %c0_i32, %c0_i32_0 : i32, i32
  }
  func.func @transform_4(%arg0: i32) -> (i32, i32) {
    %c0_i32 = arith.constant 0 : i32
    %c0_i32_0 = arith.constant 0 : i32
    %c0_i32_1 = arith.constant 0 : i32
    return %c0_i32, %c0_i32_0 : i32, i32
  }
  func.func @transform_5(%arg0: i32) -> (i32, i32) {
    %c0_i32 = arith.constant 0 : i32
    %c0_i32_0 = arith.constant 0 : i32
    %c0_i32_1 = arith.constant 0 : i32
    return %c0_i32, %c0_i32_0 : i32, i32
  }
  func.func @transform_6(%arg0: i32) -> (i32, i32) {
    %c0_i32 = arith.constant 0 : i32
    %c0_i32_0 = arith.constant 0 : i32
    %c0_i32_1 = arith.constant 0 : i32
    return %c0_i32, %c0_i32_0 : i32, i32
  }
  func.func @transform_7(%arg0: i32) -> (i32, i32) {
    %c0_i32 = arith.constant 0 : i32
    %c0_i32_0 = arith.constant 0 : i32
    %c0_i32_1 = arith.constant 0 : i32
    return %c0_i32, %c0_i32_0 : i32, i32
  }
  func.func @transform_8(%arg0: i32) -> (i32, i32) {
    %c0_i32 = arith.constant 0 : i32
    %c0_i32_0 = arith.constant 0 : i32
    %c0_i32_1 = arith.constant 0 : i32
    return %c0_i32, %c0_i32_0 : i32, i32
  }
  func.func @transform_9(%arg0: i32) -> (i32, i32) {
    %c0_i32 = arith.constant 0 : i32
    %c0_i32_0 = arith.constant 0 : i32
    return %arg0, %c0_i32 : i32, i32
  }
}

</mosaic_0001>

<llo_original>
// kernel: ocr_cnn_forward.1
$region0: #{ocr_cnn_forward.1}
  #allocation0 [shape = 'u32[]', space=smem, size = 0x4, offset = 0x4, fixed_abs, tag = 'smem constant byte address 0x4 - core index']
  #allocation1 [shape = 'u32[72,128]{1,0:T(1,128)}', space=vmem, size = 0x9000, scoped, tag = 'internal scratch']
  %s0 = inlined_call_operand.vmem [shape: s32[2,16], index: 0, kind: input, shape index: {}]
  %s1 = inlined_call_operand.vmem [shape: s32[2,16], index: 1, kind: input, shape index: {}]
  %s2 = inlined_call_operand.vmem [shape: f32[50,64], index: 2, kind: input, shape index: {}]
  %s3 = inlined_call_operand.vmem [shape: f32[512,192], index: 3, kind: input, shape index: {}]
  %s4 = inlined_call_operand.vmem [shape: f32[1,192], index: 4, kind: input, shape index: {}]
  %s5 = inlined_call_operand.vmem [shape: f32[192,64], index: 5, kind: input, shape index: {}]
  %s6 = inlined_call_operand.vmem [shape: f32[1,64], index: 6, kind: input, shape index: {}]
  %s7 = inlined_call_operand.vmem [shape: f32[64,128], index: 7, kind: input, shape index: {}]
  %s8 = inlined_call_operand.vmem [shape: f32[1,128], index: 8, kind: input, shape index: {}]
  %s9 = inlined_call_operand.hbm [shape: f32[2,128], index: 9, kind: output, shape index: {}]
  %s10 = sld [smem:[#allocation0]]
  $region46: #{ocr_cnn_forward.1} parent=0
    _
  %s12 = ssub.s32 1, %s10
  %s13 = scalar_select 0, %s12, %s10
  $region1: #{ocr_cnn_forward.1} parent=0
    #allocation2 [shape = 'u8[1024]{0}', space=vmem, size = 0x400, scoped, tag = 'output window, operand 0, single buffered']
    #allocation3 [shape = 's32[1]{0}', space=sflag, size = 0x4, scoped, tag = 'scoped memory for ocr_cnn_forward.1']
    %14 = vsyncpa [#allocation3], 0
    // Predicated region
    $region2: #{ocr_cnn_forward.1} parent=1 // pred_check
      _
    $region3: #{ocr_cnn_forward.1} parent=1 // pred_check_branch
      %16 = sbr.rel (0) target = $region5
    $region4: #{ocr_cnn_forward.1} parent=1 // pred_region
      _
    $region5: #{ocr_cnn_forward.1} parent=1 // pred_fallthru
      _
    // Predicated region
    $region6: #{ocr_cnn_forward.1} parent=1 // pred_check
      _
    $region7: #{ocr_cnn_forward.1} parent=1 // pred_check_branch
      %18 = sbr.rel (0) target = $region9
    $region8: #{ocr_cnn_forward.1} parent=1 // pred_region
      _
    $region9: #{ocr_cnn_forward.1} parent=1 // pred_fallthru
      _
    // Predicated region
    $region10: #{ocr_cnn_forward.1} parent=1 // pred_check
      _
    $region11: #{ocr_cnn_forward.1} parent=1 // pred_check_branch
      %20 = sbr.rel (0) target = $region13
    $region12: #{ocr_cnn_forward.1} parent=1 // pred_region
      _
    $region13: #{ocr_cnn_forward.1} parent=1 // pred_fallthru
      _
    // Predicated region
    $region14: #{ocr_cnn_forward.1} parent=1 // pred_check
      _
    $region15: #{ocr_cnn_forward.1} parent=1 // pred_check_branch
      %22 = sbr.rel (0) target = $region17
    $region16: #{ocr_cnn_forward.1} parent=1 // pred_region
      _
    $region17: #{ocr_cnn_forward.1} parent=1 // pred_fallthru
      _
    // Predicated region
    $region18: #{ocr_cnn_forward.1} parent=1 // pred_check
      _
    $region19: #{ocr_cnn_forward.1} parent=1 // pred_check_branch
      %24 = sbr.rel (0) target = $region21
    $region20: #{ocr_cnn_forward.1} parent=1 // pred_region
      _
    $region21: #{ocr_cnn_forward.1} parent=1 // pred_fallthru
      _
    // Predicated region
    $region22: #{ocr_cnn_forward.1} parent=1 // pred_check
      _
    $region23: #{ocr_cnn_forward.1} parent=1 // pred_check_branch
      %26 = sbr.rel (0) target = $region25
    $region24: #{ocr_cnn_forward.1} parent=1 // pred_region
      _
    $region25: #{ocr_cnn_forward.1} parent=1 // pred_fallthru
      _
    // Predicated region
    $region26: #{ocr_cnn_forward.1} parent=1 // pred_check
      _
    $region27: #{ocr_cnn_forward.1} parent=1 // pred_check_branch
      %28 = sbr.rel (0) target = $region29
    $region28: #{ocr_cnn_forward.1} parent=1 // pred_region
      _
    $region29: #{ocr_cnn_forward.1} parent=1 // pred_fallthru
      _
    // Predicated region
    $region30: #{ocr_cnn_forward.1} parent=1 // pred_check
      _
    $region31: #{ocr_cnn_forward.1} parent=1 // pred_check_branch
      %30 = sbr.rel (0) target = $region33
    $region32: #{ocr_cnn_forward.1} parent=1 // pred_region
      _
    $region33: #{ocr_cnn_forward.1} parent=1 // pred_fallthru
      _
    // Predicated region
    $region34: #{ocr_cnn_forward.1} parent=1 // pred_check
      _
    $region35: #{ocr_cnn_forward.1} parent=1 // pred_check_branch
      %32 = sbr.rel (0) target = $region37
    $region36: #{ocr_cnn_forward.1} parent=1 // pred_region
      _
    $region37: #{ocr_cnn_forward.1} parent=1 // pred_fallthru
      _
    %v33 = vld [vmem:[%s0] sm:$0x3]
    %v34 = vld [vmem:[%s1] sm:$0x3]
    %v35 = vrot.slane %v34, 6
    %vm36 = vcmask 1041408
    %v37 = vsel %vm36, %v33, %v35
    %v38 = vperm.slane %v37, 0
    %v39 = vlaneseq
    %v40 = vshrl.u32 %v39, 7
    %42 = vset.pattern.permute.xlu0 %v40
    %43 = vperm.xlu0 %42, %v38
    %v44 = vpop.permute.xlu0 %43
    %v45 = vlaneseq
    %v46 = vshrl.u32 %v45, 7
    %v47 = vadd.s32 %v46, 8
    %48 = vset.pattern.permute.xlu0 %v47
    %49 = vperm.xlu0 %48, %v38
    %v50 = vpop.permute.xlu0 %49
    %v51 = vperm.slane %v37, 1
    %v52 = vlaneseq
    %v53 = vshrl.u32 %v52, 7
    %55 = vset.pattern.permute.xlu0 %v53
    %56 = vperm.xlu0 %55, %v51
    %v57 = vpop.permute.xlu0 %56
    %v58 = vlaneseq
    %v59 = vshrl.u32 %v58, 7
    %v60 = vadd.s32 %v59, 8
    %61 = vset.pattern.permute.xlu0 %v60
    %62 = vperm.xlu0 %61, %v51
    %v63 = vpop.permute.xlu0 %62
    %v64 = vperm.slane %v37, 2
    %v65 = vlaneseq
    %v66 = vshrl.u32 %v65, 7
    %68 = vset.pattern.permute.xlu0 %v66
    %69 = vperm.xlu0 %68, %v64
    %v70 = vpop.permute.xlu0 %69
    %v71 = vlaneseq
    %v72 = vshrl.u32 %v71, 7
    %v73 = vadd.s32 %v72, 8
    %74 = vset.pattern.permute.xlu0 %v73
    %75 = vperm.xlu0 %74, %v64
    %v76 = vpop.permute.xlu0 %75
    %v77 = vperm.slane %v37, 3
    %v78 = vlaneseq
    %v79 = vshrl.u32 %v78, 7
    %81 = vset.pattern.permute.xlu0 %v79
    %82 = vperm.xlu0 %81, %v77
    %v83 = vpop.permute.xlu0 %82
    %v84 = vlaneseq
    %v85 = vshrl.u32 %v84, 7
    %v86 = vadd.s32 %v85, 8
    %87 = vset.pattern.permute.xlu0 %v86
    %88 = vperm.xlu0 %87, %v77
    %v89 = vpop.permute.xlu0 %88
    %v90 = vlaneseq
    %v91 = vand.u32 %v90, 127
    %vm92 = vcmp.eq.s32.totalorder %v44, %v91
    %vm93 = vcmp.eq.s32.totalorder %v50, %v91
    %vm94 = vcmp.eq.s32.totalorder %v57, %v91
    %vm95 = vcmp.eq.s32.totalorder %v63, %v91
    %vm96 = vcmp.eq.s32.totalorder %v70, %v91
    %vm97 = vcmp.eq.s32.totalorder %v76, %v91
    %vm98 = vcmp.eq.s32.totalorder %v83, %v91
    %vm99 = vcmp.eq.s32.totalorder %v89, %v91
    %v100 = vsel %vm92, 1, 0
    %v101 = vsel %vm93, 1, 0
    %v102 = vsel %vm94, 1, 0
    %v103 = vsel %vm95, 1, 0
    %v104 = vsel %vm96, 1, 0
    %v105 = vsel %vm97, 1, 0
    %v106 = vsel %vm98, 1, 0
    %v107 = vsel %vm99, 1, 0
    %v108 = vcvt.s32.f32 %v100
    %v109 = vcvt.s32.f32 %v101
    %v110 = vcvt.s32.f32 %v102
    %v111 = vcvt.s32.f32 %v103
    %v112 = vcvt.s32.f32 %v104
    %v113 = vcvt.s32.f32 %v105
    %v114 = vcvt.s32.f32 %v106
    %v115 = vcvt.s32.f32 %v107
    %v116 = vld [vmem:[%s2] sm:$0xff]
    %v117 = vld [vmem:[%s2 + $0x8] sm:$0xff]
    %v118 = vld [vmem:[%s2 + $0x10] sm:$0xff]
    %v119 = vld [vmem:[%s2 + $0x18] sm:$0xff]
    %v120 = vld [vmem:[%s2 + $0x20] sm:$0xff]
    %v121 = vld [vmem:[%s2 + $0x28] sm:$0xff]
    %v122 = vld [vmem:[%s2 + $0x30] sm:$0x3]
    %vm123 = vcmask 408576
    %v125 = vsel %vm123, %v108, 0
    %v128 = vsel %vm123, %v109, 0
    %v131 = vsel %vm123, %v110, 0
    %v134 = vsel %vm123, %v111, 0
    %v137 = vsel %vm123, %v112, 0
    %v140 = vsel %vm123, %v113, 0
    %v143 = vsel %vm123, %v114, 0
    %v146 = vsel %vm123, %v115, 0
    %v149 = vsel %vm36, %v122, 0
    %151 = vmatpush.msra.mxu0 0.0
    %152 = vmatpush.msra.mxu0 0.0
    %153 = vmatpush.msra.mxu0 0.0
    %154 = vmatpush.msra.mxu0 0.0
    %155 = vmatpush.msra.mxu0 0.0
    %156 = vmatpush.msra.mxu0 0.0
    %157 = vmatpush.msra.mxu0 0.0
    %158 = vmatpush.msra.mxu0 0.0
    %159 = vmatpush.msra.mxu0 0.0
    %160 = vmatpush.msra.mxu0 %v149
    %161 = vmatpush.msra.mxu0 %v121
    %162 = vmatpush.msra.mxu0 %v120
    %163 = vmatpush.msra.mxu0 %v119
    %164 = vmatpush.msra.mxu0 %v118
    %165 = vmatpush.msra.mxu0 %v117
    %166 = vmatpush.msra.mxu0 %v116
    %167 = vmatmul.f32.gmra.mxu0 %v125
    %v168 = vpop.f32.mrf.mxu0
    %v169 = vadd.f32 0.0, %v168
    %170 = vmatmul.f32.gmra.mxu0 %v128
    %v171 = vpop.f32.mrf.mxu0
    %v172 = vadd.f32 0.0, %v171
    %173 = vmatmul.f32.gmra.mxu0 %v131
    %v174 = vpop.f32.mrf.mxu0
    %v175 = vadd.f32 0.0, %v174
    %176 = vmatmul.f32.gmra.mxu0 %v134
    %v177 = vpop.f32.mrf.mxu0
    %v178 = vadd.f32 0.0, %v177
    %179 = vmatmul.f32.gmra.mxu0 %v137
    %v180 = vpop.f32.mrf.mxu0
    %v181 = vadd.f32 0.0, %v180
    %182 = vmatmul.f32.gmra.mxu0 %v140
    %v183 = vpop.f32.mrf.mxu0
    %v184 = vadd.f32 0.0, %v183
    %185 = vmatmul.f32.gmra.mxu0 %v143
    %v186 = vpop.f32.mrf.mxu0
    %v187 = vadd.f32 0.0, %v186
    %188 = vmatmul.f32.gmra.mxu0 %v146
    %v189 = vpop.f32.mrf.mxu0
    %v190 = vadd.f32 0.0, %v189
    %191 = vdwg.mxu0
    %vm201 = vcmask 1046528
    %v202 = vrot.slane %v169, 1
    %v203 = vrot.slane %v172, 1
    %v204 = vsel %vm201, %v202, %v203
    %v205 = vrot.slane 0.0, 1
    %v206 = vsel %vm201, %v203, %v205
    %v207 = vrot.slane %v175, 1
    %v208 = vrot.slane %v178, 1
    %v209 = vsel %vm201, %v207, %v208
    %v210 = vsel %vm201, %v208, %v205
    %v211 = vrot.slane %v181, 1
    %v212 = vrot.slane %v184, 1
    %v213 = vsel %vm201, %v211, %v212
    %v214 = vsel %vm201, %v212, %v205
    %v215 = vrot.slane %v187, 1
    %v216 = vrot.slane %v190, 1
    %v217 = vsel %vm201, %v215, %v216
    %v218 = vsel %vm201, %v216, %v205
    %219 = vrot.lane.b32.xlu0 %v204, 64
    %v220 = vpop.permute.xlu0 %219
    %221 = vrot.lane.b32.xlu0 %v206, 64
    %v222 = vpop.permute.xlu0 %221
    %223 = vrot.lane.b32.xlu0 %v209, 64
    %v224 = vpop.permute.xlu0 %223
    %225 = vrot.lane.b32.xlu0 %v210, 64
    %v226 = vpop.permute.xlu0 %225
    %227 = vrot.lane.b32.xlu0 %v213, 64
    %v228 = vpop.permute.xlu0 %227
    %229 = vrot.lane.b32.xlu0 %v214, 64
    %v230 = vpop.permute.xlu0 %229
    %231 = vrot.lane.b32.xlu0 %v217, 64
    %v232 = vpop.permute.xlu0 %231
    %233 = vrot.lane.b32.xlu0 %v218, 64
    %v234 = vpop.permute.xlu0 %233
    %vm243 = vcmask 1045504
    %v244 = vrot.slane %v169, 2
    %v245 = vrot.slane %v172, 2
    %v246 = vsel %vm243, %v244, %v245
    %v247 = vrot.slane 0.0, 2
    %v248 = vsel %vm243, %v245, %v247
    %v249 = vrot.slane %v175, 2
    %v250 = vrot.slane %v178, 2
    %v251 = vsel %vm243, %v249, %v250
    %v252 = vsel %vm243, %v250, %v247
    %v253 = vrot.slane %v181, 2
    %v254 = vrot.slane %v184, 2
    %v255 = vsel %vm243, %v253, %v254
    %v256 = vsel %vm243, %v254, %v247
    %v257 = vrot.slane %v187, 2
    %v258 = vrot.slane %v190, 2
    %v259 = vsel %vm243, %v257, %v258
    %v260 = vsel %vm243, %v258, %v247
    %vm269 = vcmask 1044480
    %v270 = vrot.slane %v169, 3
    %v271 = vrot.slane %v172, 3
    %v272 = vsel %vm269, %v270, %v271
    %v273 = vrot.slane 0.0, 3
    %v274 = vsel %vm269, %v271, %v273
    %v275 = vrot.slane %v175, 3
    %v276 = vrot.slane %v178, 3
    %v277 = vsel %vm269, %v275, %v276
    %v278 = vsel %vm269, %v276, %v273
    %v279 = vrot.slane %v181, 3
    %v280 = vrot.slane %v184, 3
    %v281 = vsel %vm269, %v279, %v280
    %v282 = vsel %vm269, %v280, %v273
    %v283 = vrot.slane %v187, 3
    %v284 = vrot.slane %v190, 3
    %v285 = vsel %vm269, %v283, %v284
    %v286 = vsel %vm269, %v284, %v273
    %287 = vrot.lane.b32.xlu0 %v272, 64
    %v288 = vpop.permute.xlu0 %287
    %289 = vrot.lane.b32.xlu0 %v274, 64
    %v290 = vpop.permute.xlu0 %289
    %291 = vrot.lane.b32.xlu0 %v277, 64
    %v292 = vpop.permute.xlu0 %291
    %293 = vrot.lane.b32.xlu0 %v278, 64
    %v294 = vpop.permute.xlu0 %293
    %295 = vrot.lane.b32.xlu0 %v281, 64
    %v296 = vpop.permute.xlu0 %295
    %297 = vrot.lane.b32.xlu0 %v282, 64
    %v298 = vpop.permute.xlu0 %297
    %299 = vrot.lane.b32.xlu0 %v285, 64
    %v300 = vpop.permute.xlu0 %299
    %301 = vrot.lane.b32.xlu0 %v286, 64
    %v302 = vpop.permute.xlu0 %301
    %vm311 = vcmask 1043456
    %v312 = vrot.slane %v169, 4
    %v313 = vrot.slane %v172, 4
    %v314 = vsel %vm311, %v312, %v313
    %v315 = vrot.slane 0.0, 4
    %v316 = vsel %vm311, %v313, %v315
    %v317 = vrot.slane %v175, 4
    %v318 = vrot.slane %v178, 4
    %v319 = vsel %vm311, %v317, %v318
    %v320 = vsel %vm311, %v318, %v315
    %v321 = vrot.slane %v181, 4
    %v322 = vrot.slane %v184, 4
    %v323 = vsel %vm311, %v321, %v322
    %v324 = vsel %vm311, %v322, %v315
    %v325 = vrot.slane %v187, 4
    %v326 = vrot.slane %v190, 4
    %v327 = vsel %vm311, %v325, %v326
    %v328 = vsel %vm311, %v326, %v315
    %vm337 = vcmask 1042432
    %v338 = vrot.slane %v169, 5
    %v339 = vrot.slane %v172, 5
    %v340 = vsel %vm337, %v338, %v339
    %v341 = vrot.slane 0.0, 5
    %v342 = vsel %vm337, %v339, %v341
    %v343 = vrot.slane %v175, 5
    %v344 = vrot.slane %v178, 5
    %v345 = vsel %vm337, %v343, %v344
    %v346 = vsel %vm337, %v344, %v341
    %v347 = vrot.slane %v181, 5
    %v348 = vrot.slane %v184, 5
    %v349 = vsel %vm337, %v347, %v348
    %v350 = vsel %vm337, %v348, %v341
    %v351 = vrot.slane %v187, 5
    %v352 = vrot.slane %v190, 5
    %v353 = vsel %vm337, %v351, %v352
    %v354 = vsel %vm337, %v352, %v341
    %355 = vrot.lane.b32.xlu0 %v340, 64
    %v356 = vpop.permute.xlu0 %355
    %357 = vrot.lane.b32.xlu0 %v342, 64
    %v358 = vpop.permute.xlu0 %357
    %359 = vrot.lane.b32.xlu0 %v345, 64
    %v360 = vpop.permute.xlu0 %359
    %361 = vrot.lane.b32.xlu0 %v346, 64
    %v362 = vpop.permute.xlu0 %361
    %363 = vrot.lane.b32.xlu0 %v349, 64
    %v364 = vpop.permute.xlu0 %363
    %365 = vrot.lane.b32.xlu0 %v350, 64
    %v366 = vpop.permute.xlu0 %365
    %367 = vrot.lane.b32.xlu0 %v353, 64
    %v368 = vpop.permute.xlu0 %367
    %369 = vrot.lane.b32.xlu0 %v354, 64
    %v370 = vpop.permute.xlu0 %369
    %v379 = vrot.slane %v169, 6
    %v380 = vrot.slane %v172, 6
    %v381 = vsel %vm36, %v379, %v380
    %v382 = vrot.slane 0.0, 6
    %v383 = vsel %vm36, %v380, %v382
    %v384 = vrot.slane %v175, 6
    %v385 = vrot.slane %v178, 6
    %v386 = vsel %vm36, %v384, %v385
    %v387 = vsel %vm36, %v385, %v382
    %v388 = vrot.slane %v181, 6
    %v389 = vrot.slane %v184, 6
    %v390 = vsel %vm36, %v388, %v389
    %v391 = vsel %vm36, %v389, %v382
    %v392 = vrot.slane %v187, 6
    %v393 = vrot.slane %v190, 6
    %v394 = vsel %vm36, %v392, %v393
    %v395 = vsel %vm36, %v393, %v382
    %vm404 = vcmask 1040384
    %v405 = vrot.slane %v169, 7
    %v406 = vrot.slane %v172, 7
    %v407 = vsel %vm404, %v405, %v406
    %v408 = vrot.slane 0.0, 7
    %v409 = vsel %vm404, %v406, %v408
    %v410 = vrot.slane %v175, 7
    %v411 = vrot.slane %v178, 7
    %v412 = vsel %vm404, %v410, %v411
    %v413 = vsel %vm404, %v411, %v408
    %v414 = vrot.slane %v181, 7
    %v415 = vrot.slane %v184, 7
    %v416 = vsel %vm404, %v414, %v415
    %v417 = vsel %vm404, %v415, %v408
    %v418 = vrot.slane %v187, 7
    %v419 = vrot.slane %v190, 7
    %v420 = vsel %vm404, %v418, %v419
    %v421 = vsel %vm404, %v419, %v408
    %422 = vrot.lane.b32.xlu0 %v407, 64
    %v423 = vpop.permute.xlu0 %422
    %424 = vrot.lane.b32.xlu0 %v409, 64
    %v425 = vpop.permute.xlu0 %424
    %426 = vrot.lane.b32.xlu0 %v412, 64
    %v427 = vpop.permute.xlu0 %426
    %428 = vrot.lane.b32.xlu0 %v413, 64
    %v429 = vpop.permute.xlu0 %428
    %430 = vrot.lane.b32.xlu0 %v416, 64
    %v431 = vpop.permute.xlu0 %430
    %432 = vrot.lane.b32.xlu0 %v417, 64
    %v433 = vpop.permute.xlu0 %432
    %434 = vrot.lane.b32.xlu0 %v420, 64
    %v435 = vpop.permute.xlu0 %434
    %436 = vrot.lane.b32.xlu0 %v421, 64
    %v437 = vpop.permute.xlu0 %436
    %vm446 = vcmask 523264
    %v447 = vsel %vm446, %v169, %v220
    %v448 = vsel %vm446, %v172, %v222
    %v449 = vsel %vm446, %v175, %v224
    %v450 = vsel %vm446, %v178, %v226
    %v451 = vsel %vm446, %v181, %v228
    %v452 = vsel %vm446, %v184, %v230
    %v453 = vsel %vm446, %v187, %v232
    %v454 = vsel %vm446, %v190, %v234
    %v455 = vsel %vm446, %v246, %v288
    %v456 = vsel %vm446, %v248, %v290
    %v457 = vsel %vm446, %v251, %v292
    %v458 = vsel %vm446, %v252, %v294
    %v459 = vsel %vm446, %v255, %v296
    %v460 = vsel %vm446, %v256, %v298
    %v461 = vsel %vm446, %v259, %v300
    %v462 = vsel %vm446, %v260, %v302
    %v463 = vsel %vm446, %v314, %v356
    %v464 = vsel %vm446, %v316, %v358
    %v465 = vsel %vm446, %v319, %v360
    %v466 = vsel %vm446, %v320, %v362
    %v467 = vsel %vm446, %v323, %v364
    %v468 = vsel %vm446, %v324, %v366
    %v469 = vsel %vm446, %v327, %v368
    %v470 = vsel %vm446, %v328, %v370
    %v471 = vsel %vm446, %v381, %v423
    %v472 = vsel %vm446, %v383, %v425
    %v473 = vsel %vm446, %v386, %v427
    %v474 = vsel %vm446, %v387, %v429
    %v475 = vsel %vm446, %v390, %v431
    %v476 = vsel %vm446, %v391, %v433
    %v477 = vsel %vm446, %v394, %v435
    %v478 = vsel %vm446, %v395, %v437
    %v479 = vld [vmem:[%s3] sm:$0xff]
    %v480 = vld [vmem:[%s3 + $0x8] sm:$0xff]
    %v481 = vld [vmem:[%s3 + $0x10] sm:$0xff]
    %v482 = vld [vmem:[%s3 + $0x18] sm:$0xff]
    %v483 = vld [vmem:[%s3 + $0x20] sm:$0xff]
    %v484 = vld [vmem:[%s3 + $0x28] sm:$0xff]
    %v485 = vld [vmem:[%s3 + $0x30] sm:$0xff]
    %v486 = vld [vmem:[%s3 + $0x38] sm:$0xff]
    %v487 = vld [vmem:[%s3 + $0x40] sm:$0xff]
    %v488 = vld [vmem:[%s3 + $0x48] sm:$0xff]
    %v489 = vld [vmem:[%s3 + $0x50] sm:$0xff]
    %v490 = vld [vmem:[%s3 + $0x58] sm:$0xff]
    %v491 = vld [vmem:[%s3 + $0x60] sm:$0xff]
    %v492 = vld [vmem:[%s3 + $0x68] sm:$0xff]
    %v493 = vld [vmem:[%s3 + $0x70] sm:$0xff]
    %v494 = vld [vmem:[%s3 + $0x78] sm:$0xff]
    %v495 = vld [vmem:[%s3 + $0x80] sm:$0xff]
    %v496 = vld [vmem:[%s3 + $0x88] sm:$0xff]
    %v497 = vld [vmem:[%s3 + $0x90] sm:$0xff]
    %v498 = vld [vmem:[%s3 + $0x98] sm:$0xff]
    %v499 = vld [vmem:[%s3 + $0xa0] sm:$0xff]
    %v500 = vld [vmem:[%s3 + $0xa8] sm:$0xff]
    %v501 = vld [vmem:[%s3 + $0xb0] sm:$0xff]
    %v502 = vld [vmem:[%s3 + $0xb8] sm:$0xff]
    %v503 = vld [vmem:[%s3 + $0xc0] sm:$0xff]
    %v504 = vld [vmem:[%s3 + $0xc8] sm:$0xff]
    %v505 = vld [vmem:[%s3 + $0xd0] sm:$0xff]
    %v506 = vld [vmem:[%s3 + $0xd8] sm:$0xff]
    %v507 = vld [vmem:[%s3 + $0xe0] sm:$0xff]
    %v508 = vld [vmem:[%s3 + $0xe8] sm:$0xff]
    %v509 = vld [vmem:[%s3 + $0xf0] sm:$0xff]
    %v510 = vld [vmem:[%s3 + $0xf8] sm:$0xff]
    %v511 = vld [vmem:[%s3 + $0x100] sm:$0xff]
    %v512 = vld [vmem:[%s3 + $0x108] sm:$0xff]
    %v513 = vld [vmem:[%s3 + $0x110] sm:$0xff]
    %v514 = vld [vmem:[%s3 + $0x118] sm:$0xff]
    %v515 = vld [vmem:[%s3 + $0x120] sm:$0xff]
    %v516 = vld [vmem:[%s3 + $0x128] sm:$0xff]
    %v517 = vld [vmem:[%s3 + $0x130] sm:$0xff]
    %v518 = vld [vmem:[%s3 + $0x138] sm:$0xff]
    %v519 = vld [vmem:[%s3 + $0x140] sm:$0xff]
    %v520 = vld [vmem:[%s3 + $0x148] sm:$0xff]
    %v521 = vld [vmem:[%s3 + $0x150] sm:$0xff]
    %v522 = vld [vmem:[%s3 + $0x158] sm:$0xff]
    %v523 = vld [vmem:[%s3 + $0x160] sm:$0xff]
    %v524 = vld [vmem:[%s3 + $0x168] sm:$0xff]
    %v525 = vld [vmem:[%s3 + $0x170] sm:$0xff]
    %v526 = vld [vmem:[%s3 + $0x178] sm:$0xff]
    %v527 = vld [vmem:[%s3 + $0x180] sm:$0xff]
    %v528 = vld [vmem:[%s3 + $0x188] sm:$0xff]
    %v529 = vld [vmem:[%s3 + $0x190] sm:$0xff]
    %v530 = vld [vmem:[%s3 + $0x198] sm:$0xff]
    %v531 = vld [vmem:[%s3 + $0x1a0] sm:$0xff]
    %v532 = vld [vmem:[%s3 + $0x1a8] sm:$0xff]
    %v533 = vld [vmem:[%s3 + $0x1b0] sm:$0xff]
    %v534 = vld [vmem:[%s3 + $0x1b8] sm:$0xff]
    %v535 = vld [vmem:[%s3 + $0x1c0] sm:$0xff]
    %v536 = vld [vmem:[%s3 + $0x1c8] sm:$0xff]
    %v537 = vld [vmem:[%s3 + $0x1d0] sm:$0xff]
    %v538 = vld [vmem:[%s3 + $0x1d8] sm:$0xff]
    %v539 = vld [vmem:[%s3 + $0x1e0] sm:$0xff]
    %v540 = vld [vmem:[%s3 + $0x1e8] sm:$0xff]
    %v541 = vld [vmem:[%s3 + $0x1f0] sm:$0xff]
    %v542 = vld [vmem:[%s3 + $0x1f8] sm:$0xff]
    %v543 = vld [vmem:[%s3 + $0x200] sm:$0xff]
    %v544 = vld [vmem:[%s3 + $0x208] sm:$0xff]
    %v545 = vld [vmem:[%s3 + $0x210] sm:$0xff]
    %v546 = vld [vmem:[%s3 + $0x218] sm:$0xff]
    %v547 = vld [vmem:[%s3 + $0x220] sm:$0xff]
    %v548 = vld [vmem:[%s3 + $0x228] sm:$0xff]
    %v549 = vld [vmem:[%s3 + $0x230] sm:$0xff]
    %v550 = vld [vmem:[%s3 + $0x238] sm:$0xff]
    %v551 = vld [vmem:[%s3 + $0x240] sm:$0xff]
    %v552 = vld [vmem:[%s3 + $0x248] sm:$0xff]
    %v553 = vld [vmem:[%s3 + $0x250] sm:$0xff]
    %v554 = vld [vmem:[%s3 + $0x258] sm:$0xff]
    %v555 = vld [vmem:[%s3 + $0x260] sm:$0xff]
    %v556 = vld [vmem:[%s3 + $0x268] sm:$0xff]
    %v557 = vld [vmem:[%s3 + $0x270] sm:$0xff]
    %v558 = vld [vmem:[%s3 + $0x278] sm:$0xff]
    %v559 = vld [vmem:[%s3 + $0x280] sm:$0xff]
    %v560 = vld [vmem:[%s3 + $0x288] sm:$0xff]
    %v561 = vld [vmem:[%s3 + $0x290] sm:$0xff]
    %v562 = vld [vmem:[%s3 + $0x298] sm:$0xff]
    %v563 = vld [vmem:[%s3 + $0x2a0] sm:$0xff]
    %v564 = vld [vmem:[%s3 + $0x2a8] sm:$0xff]
    %v565 = vld [vmem:[%s3 + $0x2b0] sm:$0xff]
    %v566 = vld [vmem:[%s3 + $0x2b8] sm:$0xff]
    %v567 = vld [vmem:[%s3 + $0x2c0] sm:$0xff]
    %v568 = vld [vmem:[%s3 + $0x2c8] sm:$0xff]
    %v569 = vld [vmem:[%s3 + $0x2d0] sm:$0xff]
    %v570 = vld [vmem:[%s3 + $0x2d8] sm:$0xff]
    %v571 = vld [vmem:[%s3 + $0x2e0] sm:$0xff]
    %v572 = vld [vmem:[%s3 + $0x2e8] sm:$0xff]
    %v573 = vld [vmem:[%s3 + $0x2f0] sm:$0xff]
    %v574 = vld [vmem:[%s3 + $0x2f8] sm:$0xff]
    %v575 = vld [vmem:[%s3 + $0x300] sm:$0xff]
    %v576 = vld [vmem:[%s3 + $0x308] sm:$0xff]
    %v577 = vld [vmem:[%s3 + $0x310] sm:$0xff]
    %v578 = vld [vmem:[%s3 + $0x318] sm:$0xff]
    %v579 = vld [vmem:[%s3 + $0x320] sm:$0xff]
    %v580 = vld [vmem:[%s3 + $0x328] sm:$0xff]
    %v581 = vld [vmem:[%s3 + $0x330] sm:$0xff]
    %v582 = vld [vmem:[%s3 + $0x338] sm:$0xff]
    %v583 = vld [vmem:[%s3 + $0x340] sm:$0xff]
    %v584 = vld [vmem:[%s3 + $0x348] sm:$0xff]
    %v585 = vld [vmem:[%s3 + $0x350] sm:$0xff]
    %v586 = vld [vmem:[%s3 + $0x358] sm:$0xff]
    %v587 = vld [vmem:[%s3 + $0x360] sm:$0xff]
    %v588 = vld [vmem:[%s3 + $0x368] sm:$0xff]
    %v589 = vld [vmem:[%s3 + $0x370] sm:$0xff]
    %v590 = vld [vmem:[%s3 + $0x378] sm:$0xff]
    %v591 = vld [vmem:[%s3 + $0x380] sm:$0xff]
    %v592 = vld [vmem:[%s3 + $0x388] sm:$0xff]
    %v593 = vld [vmem:[%s3 + $0x390] sm:$0xff]
    %v594 = vld [vmem:[%s3 + $0x398] sm:$0xff]
    %v595 = vld [vmem:[%s3 + $0x3a0] sm:$0xff]
    %v596 = vld [vmem:[%s3 + $0x3a8] sm:$0xff]
    %v597 = vld [vmem:[%s3 + $0x3b0] sm:$0xff]
    %v598 = vld [vmem:[%s3 + $0x3b8] sm:$0xff]
    %v599 = vld [vmem:[%s3 + $0x3c0] sm:$0xff]
    %v600 = vld [vmem:[%s3 + $0x3c8] sm:$0xff]
    %v601 = vld [vmem:[%s3 + $0x3d0] sm:$0xff]
    %v602 = vld [vmem:[%s3 + $0x3d8] sm:$0xff]
    %v603 = vld [vmem:[%s3 + $0x3e0] sm:$0xff]
    %v604 = vld [vmem:[%s3 + $0x3e8] sm:$0xff]
    %v605 = vld [vmem:[%s3 + $0x3f0] sm:$0xff]
    %v606 = vld [vmem:[%s3 + $0x3f8] sm:$0xff]
    %v607 = vld [vmem:[%s4] sm:$0x3]
    %v609 = vperm.slane %v607, 0
    %v610 = vperm.slane %v607, 1
    %613 = vmatpush.msra.mxu0 %v509
    %614 = vmatpush.msra.mxu0 %v507
    %615 = vmatpush.msra.mxu0 %v505
    %616 = vmatpush.msra.mxu0 %v503
    %617 = vmatpush.msra.mxu0 %v501
    %618 = vmatpush.msra.mxu0 %v499
    %619 = vmatpush.msra.mxu0 %v497
    %620 = vmatpush.msra.mxu0 %v495
    %621 = vmatpush.msra.mxu0 %v493
    %622 = vmatpush.msra.mxu0 %v491
    %623 = vmatpush.msra.mxu0 %v489
    %624 = vmatpush.msra.mxu0 %v487
    %625 = vmatpush.msra.mxu0 %v485
    %626 = vmatpush.msra.mxu0 %v483
    %627 = vmatpush.msra.mxu0 %v481
    %628 = vmatpush.msra.mxu0 %v479
    %629 = vmatmul.f32.gmra.mxu0 %v447
    %v630 = vpop.f32.mrf.mxu0
    %v631 = vadd.f32 %v609, %v630
    %632 = vmatmul.f32.gmra.mxu0 %v448
    %v633 = vpop.f32.mrf.mxu0
    %v634 = vadd.f32 %v609, %v633
    %635 = vmatmul.f32.gmra.mxu0 %v449
    %v636 = vpop.f32.mrf.mxu0
    %v637 = vadd.f32 %v609, %v636
    %638 = vmatmul.f32.gmra.mxu0 %v450
    %v639 = vpop.f32.mrf.mxu0
    %v640 = vadd.f32 %v609, %v639
    %641 = vmatmul.f32.gmra.mxu0 %v451
    %v642 = vpop.f32.mrf.mxu0
    %v643 = vadd.f32 %v609, %v642
    %644 = vmatmul.f32.gmra.mxu0 %v452
    %v645 = vpop.f32.mrf.mxu0
    %v646 = vadd.f32 %v609, %v645
    %647 = vmatmul.f32.gmra.mxu0 %v453
    %v648 = vpop.f32.mrf.mxu0
    %v649 = vadd.f32 %v609, %v648
    %650 = vmatmul.f32.gmra.mxu0 %v454
    %v651 = vpop.f32.mrf.mxu0
    %v652 = vadd.f32 %v609, %v651
    %653 = vdwg.mxu0
    %654 = vmatpush.msra.mxu0 %v541
    %655 = vmatpush.msra.mxu0 %v539
    %656 = vmatpush.msra.mxu0 %v537
    %657 = vmatpush.msra.mxu0 %v535
    %658 = vmatpush.msra.mxu0 %v533
    %659 = vmatpush.msra.mxu0 %v531
    %660 = vmatpush.msra.mxu0 %v529
    %661 = vmatpush.msra.mxu0 %v527
    %662 = vmatpush.msra.mxu0 %v525
    %663 = vmatpush.msra.mxu0 %v523
    %664 = vmatpush.msra.mxu0 %v521
    %665 = vmatpush.msra.mxu0 %v519
    %666 = vmatpush.msra.mxu0 %v517
    %667 = vmatpush.msra.mxu0 %v515
    %668 = vmatpush.msra.mxu0 %v513
    %669 = vmatpush.msra.mxu0 %v511
    %670 = vmatmul.f32.gmra.mxu0 %v455
    %v671 = vpop.f32.mrf.mxu0
    %v672 = vadd.f32 %v631, %v671
    %673 = vmatmul.f32.gmra.mxu0 %v456
    %v674 = vpop.f32.mrf.mxu0
    %v675 = vadd.f32 %v634, %v674
    %676 = vmatmul.f32.gmra.mxu0 %v457
    %v677 = vpop.f32.mrf.mxu0
    %v678 = vadd.f32 %v637, %v677
    %679 = vmatmul.f32.gmra.mxu0 %v458
    %v680 = vpop.f32.mrf.mxu0
    %v681 = vadd.f32 %v640, %v680
    %682 = vmatmul.f32.gmra.mxu0 %v459
    %v683 = vpop.f32.mrf.mxu0
    %v684 = vadd.f32 %v643, %v683
    %685 = vmatmul.f32.gmra.mxu0 %v460
    %v686 = vpop.f32.mrf.mxu0
    %v687 = vadd.f32 %v646, %v686
    %688 = vmatmul.f32.gmra.mxu0 %v461
    %v689 = vpop.f32.mrf.mxu0
    %v690 = vadd.f32 %v649, %v689
    %691 = vmatmul.f32.gmra.mxu0 %v462
    %v692 = vpop.f32.mrf.mxu0
    %v693 = vadd.f32 %v652, %v692
    %694 = vdwg.mxu0
    %695 = vmatpush.msra.mxu0 %v573
    %696 = vmatpush.msra.mxu0 %v571
    %697 = vmatpush.msra.mxu0 %v569
    %698 = vmatpush.msra.mxu0 %v567
    %699 = vmatpush.msra.mxu0 %v565
    %700 = vmatpush.msra.mxu0 %v563
    %701 = vmatpush.msra.mxu0 %v561
    %702 = vmatpush.msra.mxu0 %v559
    %703 = vmatpush.msra.mxu0 %v557
    %704 = vmatpush.msra.mxu0 %v555
    %705 = vmatpush.msra.mxu0 %v553
    %706 = vmatpush.msra.mxu0 %v551
    %707 = vmatpush.msra.mxu0 %v549
    %708 = vmatpush.msra.mxu0 %v547
    %709 = vmatpush.msra.mxu0 %v545
    %710 = vmatpush.msra.mxu0 %v543
    %711 = vmatmul.f32.gmra.mxu0 %v463
    %v712 = vpop.f32.mrf.mxu0
    %v713 = vadd.f32 %v672, %v712
    %714 = vmatmul.f32.gmra.mxu0 %v464
    %v715 = vpop.f32.mrf.mxu0
    %v716 = vadd.f32 %v675, %v715
    %717 = vmatmul.f32.gmra.mxu0 %v465
    %v718 = vpop.f32.mrf.mxu0
    %v719 = vadd.f32 %v678, %v718
    %720 = vmatmul.f32.gmra.mxu0 %v466
    %v721 = vpop.f32.mrf.mxu0
    %v722 = vadd.f32 %v681, %v721
    %723 = vmatmul.f32.gmra.mxu0 %v467
    %v724 = vpop.f32.mrf.mxu0
    %v725 = vadd.f32 %v684, %v724
    %726 = vmatmul.f32.gmra.mxu0 %v468
    %v727 = vpop.f32.mrf.mxu0
    %v728 = vadd.f32 %v687, %v727
    %729 = vmatmul.f32.gmra.mxu0 %v469
    %v730 = vpop.f32.mrf.mxu0
    %v731 = vadd.f32 %v690, %v730
    %732 = vmatmul.f32.gmra.mxu0 %v470
    %v733 = vpop.f32.mrf.mxu0
    %v734 = vadd.f32 %v693, %v733
    %735 = vdwg.mxu0
    %736 = vmatpush.msra.mxu0 %v605
    %737 = vmatpush.msra.mxu0 %v603
    %738 = vmatpush.msra.mxu0 %v601
    %739 = vmatpush.msra.mxu0 %v599
    %740 = vmatpush.msra.mxu0 %v597
    %741 = vmatpush.msra.mxu0 %v595
    %742 = vmatpush.msra.mxu0 %v593
    %743 = vmatpush.msra.mxu0 %v591
    %744 = vmatpush.msra.mxu0 %v589
    %745 = vmatpush.msra.mxu0 %v587
    %746 = vmatpush.msra.mxu0 %v585
    %747 = vmatpush.msra.mxu0 %v583
    %748 = vmatpush.msra.mxu0 %v581
    %749 = vmatpush.msra.mxu0 %v579
    %750 = vmatpush.msra.mxu0 %v577
    %751 = vmatpush.msra.mxu0 %v575
    %752 = vmatmul.f32.gmra.mxu0 %v471
    %v753 = vpop.f32.mrf.mxu0
    %v754 = vadd.f32 %v713, %v753
    %755 = vmatmul.f32.gmra.mxu0 %v472
    %v756 = vpop.f32.mrf.mxu0
    %v757 = vadd.f32 %v716, %v756
    %758 = vmatmul.f32.gmra.mxu0 %v473
    %v759 = vpop.f32.mrf.mxu0
    %v760 = vadd.f32 %v719, %v759
    %761 = vmatmul.f32.gmra.mxu0 %v474
    %v762 = vpop.f32.mrf.mxu0
    %v763 = vadd.f32 %v722, %v762
    %764 = vmatmul.f32.gmra.mxu0 %v475
    %v765 = vpop.f32.mrf.mxu0
    %v766 = vadd.f32 %v725, %v765
    %767 = vmatmul.f32.gmra.mxu0 %v476
    %v768 = vpop.f32.mrf.mxu0
    %v769 = vadd.f32 %v728, %v768
    %770 = vmatmul.f32.gmra.mxu0 %v477
    %v771 = vpop.f32.mrf.mxu0
    %v772 = vadd.f32 %v731, %v771
    %773 = vmatmul.f32.gmra.mxu0 %v478
    %v774 = vpop.f32.mrf.mxu0
    %v775 = vadd.f32 %v734, %v774
    %776 = vdwg.mxu0
    %777 = vmatpush.msra.mxu0 %v510
    %778 = vmatpush.msra.mxu0 %v508
    %779 = vmatpush.msra.mxu0 %v506
    %780 = vmatpush.msra.mxu0 %v504
    %781 = vmatpush.msra.mxu0 %v502
    %782 = vmatpush.msra.mxu0 %v500
    %783 = vmatpush.msra.mxu0 %v498
    %784 = vmatpush.msra.mxu0 %v496
    %785 = vmatpush.msra.mxu0 %v494
    %786 = vmatpush.msra.mxu0 %v492
    %787 = vmatpush.msra.mxu0 %v490
    %788 = vmatpush.msra.mxu0 %v488
    %789 = vmatpush.msra.mxu0 %v486
    %790 = vmatpush.msra.mxu0 %v484
    %791 = vmatpush.msra.mxu0 %v482
    %792 = vmatpush.msra.mxu0 %v480
    %793 = vmatmul.f32.gmra.mxu0 %v447
    %v794 = vpop.f32.mrf.mxu0
    %v795 = vadd.f32 %v610, %v794
    %796 = vmatmul.f32.gmra.mxu0 %v448
    %v797 = vpop.f32.mrf.mxu0
    %v798 = vadd.f32 %v610, %v797
    %799 = vmatmul.f32.gmra.mxu0 %v449
    %v800 = vpop.f32.mrf.mxu0
    %v801 = vadd.f32 %v610, %v800
    %802 = vmatmul.f32.gmra.mxu0 %v450
    %v803 = vpop.f32.mrf.mxu0
    %v804 = vadd.f32 %v610, %v803
    %805 = vmatmul.f32.gmra.mxu0 %v451
    %v806 = vpop.f32.mrf.mxu0
    %v807 = vadd.f32 %v610, %v806
    %808 = vmatmul.f32.gmra.mxu0 %v452
    %v809 = vpop.f32.mrf.mxu0
    %v810 = vadd.f32 %v610, %v809
    %811 = vmatmul.f32.gmra.mxu0 %v453
    %v812 = vpop.f32.mrf.mxu0
    %v813 = vadd.f32 %v610, %v812
    %814 = vmatmul.f32.gmra.mxu0 %v454
    %v815 = vpop.f32.mrf.mxu0
    %v816 = vadd.f32 %v610, %v815
    %817 = vdwg.mxu0
    %818 = vmatpush.msra.mxu0 %v542
    %819 = vmatpush.msra.mxu0 %v540
    %820 = vmatpush.msra.mxu0 %v538
    %821 = vmatpush.msra.mxu0 %v536
    %822 = vmatpush.msra.mxu0 %v534
    %823 = vmatpush.msra.mxu0 %v532
    %824 = vmatpush.msra.mxu0 %v530
    %825 = vmatpush.msra.mxu0 %v528
    %826 = vmatpush.msra.mxu0 %v526
    %827 = vmatpush.msra.mxu0 %v524
    %828 = vmatpush.msra.mxu0 %v522
    %829 = vmatpush.msra.mxu0 %v520
    %830 = vmatpush.msra.mxu0 %v518
    %831 = vmatpush.msra.mxu0 %v516
    %832 = vmatpush.msra.mxu0 %v514
    %833 = vmatpush.msra.mxu0 %v512
    %834 = vmatmul.f32.gmra.mxu0 %v455
    %v835 = vpop.f32.mrf.mxu0
    %v836 = vadd.f32 %v795, %v835
    %837 = vmatmul.f32.gmra.mxu0 %v456
    %v838 = vpop.f32.mrf.mxu0
    %v839 = vadd.f32 %v798, %v838
    %840 = vmatmul.f32.gmra.mxu0 %v457
    %v841 = vpop.f32.mrf.mxu0
    %v842 = vadd.f32 %v801, %v841
    %843 = vmatmul.f32.gmra.mxu0 %v458
    %v844 = vpop.f32.mrf.mxu0
    %v845 = vadd.f32 %v804, %v844
    %846 = vmatmul.f32.gmra.mxu0 %v459
    %v847 = vpop.f32.mrf.mxu0
    %v848 = vadd.f32 %v807, %v847
    %849 = vmatmul.f32.gmra.mxu0 %v460
    %v850 = vpop.f32.mrf.mxu0
    %v851 = vadd.f32 %v810, %v850
    %852 = vmatmul.f32.gmra.mxu0 %v461
    %v853 = vpop.f32.mrf.mxu0
    %v854 = vadd.f32 %v813, %v853
    %855 = vmatmul.f32.gmra.mxu0 %v462
    %v856 = vpop.f32.mrf.mxu0
    %v857 = vadd.f32 %v816, %v856
    %858 = vdwg.mxu0
    %859 = vmatpush.msra.mxu0 %v574
    %860 = vmatpush.msra.mxu0 %v572
    %861 = vmatpush.msra.mxu0 %v570
    %862 = vmatpush.msra.mxu0 %v568
    %863 = vmatpush.msra.mxu0 %v566
    %864 = vmatpush.msra.mxu0 %v564
    %865 = vmatpush.msra.mxu0 %v562
    %866 = vmatpush.msra.mxu0 %v560
    %867 = vmatpush.msra.mxu0 %v558
    %868 = vmatpush.msra.mxu0 %v556
    %869 = vmatpush.msra.mxu0 %v554
    %870 = vmatpush.msra.mxu0 %v552
    %871 = vmatpush.msra.mxu0 %v550
    %872 = vmatpush.msra.mxu0 %v548
    %873 = vmatpush.msra.mxu0 %v546
    %874 = vmatpush.msra.mxu0 %v544
    %875 = vmatmul.f32.gmra.mxu0 %v463
    %v876 = vpop.f32.mrf.mxu0
    %v877 = vadd.f32 %v836, %v876
    %878 = vmatmul.f32.gmra.mxu0 %v464
    %v879 = vpop.f32.mrf.mxu0
    %v880 = vadd.f32 %v839, %v879
    %881 = vmatmul.f32.gmra.mxu0 %v465
    %v882 = vpop.f32.mrf.mxu0
    %v883 = vadd.f32 %v842, %v882
    %884 = vmatmul.f32.gmra.mxu0 %v466
    %v885 = vpop.f32.mrf.mxu0
    %v886 = vadd.f32 %v845, %v885
    %887 = vmatmul.f32.gmra.mxu0 %v467
    %v888 = vpop.f32.mrf.mxu0
    %v889 = vadd.f32 %v848, %v888
    %890 = vmatmul.f32.gmra.mxu0 %v468
    %v891 = vpop.f32.mrf.mxu0
    %v892 = vadd.f32 %v851, %v891
    %893 = vmatmul.f32.gmra.mxu0 %v469
    %v894 = vpop.f32.mrf.mxu0
    %v895 = vadd.f32 %v854, %v894
    %896 = vmatmul.f32.gmra.mxu0 %v470
    %v897 = vpop.f32.mrf.mxu0
    %v898 = vadd.f32 %v857, %v897
    %899 = vdwg.mxu0
    %900 = vmatpush.msra.mxu0 %v606
    %901 = vmatpush.msra.mxu0 %v604
    %902 = vmatpush.msra.mxu0 %v602
    %903 = vmatpush.msra.mxu0 %v600
    %904 = vmatpush.msra.mxu0 %v598
    %905 = vmatpush.msra.mxu0 %v596
    %906 = vmatpush.msra.mxu0 %v594
    %907 = vmatpush.msra.mxu0 %v592
    %908 = vmatpush.msra.mxu0 %v590
    %909 = vmatpush.msra.mxu0 %v588
    %910 = vmatpush.msra.mxu0 %v586
    %911 = vmatpush.msra.mxu0 %v584
    %912 = vmatpush.msra.mxu0 %v582
    %913 = vmatpush.msra.mxu0 %v580
    %914 = vmatpush.msra.mxu0 %v578
    %915 = vmatpush.msra.mxu0 %v576
    %916 = vmatmul.f32.gmra.mxu0 %v471
    %v917 = vpop.f32.mrf.mxu0
    %v918 = vadd.f32 %v877, %v917
    %919 = vmatmul.f32.gmra.mxu0 %v472
    %v920 = vpop.f32.mrf.mxu0
    %v921 = vadd.f32 %v880, %v920
    %922 = vmatmul.f32.gmra.mxu0 %v473
    %v923 = vpop.f32.mrf.mxu0
    %v924 = vadd.f32 %v883, %v923
    %925 = vmatmul.f32.gmra.mxu0 %v474
    %v926 = vpop.f32.mrf.mxu0
    %v927 = vadd.f32 %v886, %v926
    %928 = vmatmul.f32.gmra.mxu0 %v475
    %v929 = vpop.f32.mrf.mxu0
    %v930 = vadd.f32 %v889, %v929
    %931 = vmatmul.f32.gmra.mxu0 %v476
    %v932 = vpop.f32.mrf.mxu0
    %v933 = vadd.f32 %v892, %v932
    %934 = vmatmul.f32.gmra.mxu0 %v477
    %v935 = vpop.f32.mrf.mxu0
    %v936 = vadd.f32 %v895, %v935
    %937 = vmatmul.f32.gmra.mxu0 %v478
    %v938 = vpop.f32.mrf.mxu0
    %v939 = vadd.f32 %v898, %v938
    %940 = vdwg.mxu0
    %v941 = vmax.f32 %v754, 0.0
    %v942 = vmax.f32 %v918, 0.0
    %v943 = vmax.f32 %v757, 0.0
    %v944 = vmax.f32 %v921, 0.0
    %v945 = vmax.f32 %v760, 0.0
    %v946 = vmax.f32 %v924, 0.0
    %v947 = vmax.f32 %v763, 0.0
    %v948 = vmax.f32 %v927, 0.0
    %v949 = vmax.f32 %v766, 0.0
    %v950 = vmax.f32 %v930, 0.0
    %v951 = vmax.f32 %v769, 0.0
    %v952 = vmax.f32 %v933, 0.0
    %v953 = vmax.f32 %v772, 0.0
    %v954 = vmax.f32 %v936, 0.0
    %v955 = vmax.f32 %v775, 0.0
    %v956 = vmax.f32 %v939, 0.0
    %v957 = vlaneseq
    %v958 = vshrl.u32 %v957, 7
    %v959 = vadd.s32 %v958, 8
    %vm960 = vcmp.lt.s32.totalorder %v958, 9
    %vm961 = vcmp.lt.s32.totalorder %v959, 9
    %v962 = vsel %vm960, %v941, 0.0
    %v963 = vsel %vm960, %v942, 0.0
    %v964 = vsel %vm961, %v943, 0.0
    %v965 = vsel %vm961, %v944, 0.0
    %v966 = vsel %vm960, %v945, 0.0
    %v967 = vsel %vm960, %v946, 0.0
    %v968 = vsel %vm961, %v947, 0.0
    %v969 = vsel %vm961, %v948, 0.0
    %v970 = vsel %vm960, %v949, 0.0
    %v971 = vsel %vm960, %v950, 0.0
    %v972 = vsel %vm961, %v951, 0.0
    %v973 = vsel %vm961, %v952, 0.0
    %v974 = vsel %vm960, %v953, 0.0
    %v975 = vsel %vm960, %v954, 0.0
    %v976 = vsel %vm961, %v955, 0.0
    %v977 = vsel %vm961, %v956, 0.0
    %v978 = vmax.f32 %v962, %v964
    %v979 = vrot.slane %v978, 4
    %v980 = vmax.f32 %v978, %v979
    %v981 = vrot.slane %v980, 2
    %v982 = vmax.f32 %v980, %v981
    %v983 = vrot.slane %v982, 1
    %v984 = vmax.f32 %v982, %v983
    %v985 = vsel %vm446, %v963, -inf
    %v986 = vsel %vm446, %v965, -inf
    %v987 = vmax.f32 %v985, %v986
    %v988 = vrot.slane %v987, 4
    %v989 = vmax.f32 %v987, %v988
    %v990 = vrot.slane %v989, 2
    %v991 = vmax.f32 %v989, %v990
    %v992 = vrot.slane %v991, 1
    %v993 = vmax.f32 %v991, %v992
    %v994 = vmax.f32 %v966, %v968
    %v995 = vrot.slane %v994, 4
    %v996 = vmax.f32 %v994, %v995
    %v997 = vrot.slane %v996, 2
    %v998 = vmax.f32 %v996, %v997
    %v999 = vrot.slane %v998, 1
    %v1000 = vmax.f32 %v998, %v999
    %v1001 = vsel %vm446, %v967, -inf
    %v1002 = vsel %vm446, %v969, -inf
    %v1003 = vmax.f32 %v1001, %v1002
    %v1004 = vrot.slane %v1003, 4
    %v1005 = vmax.f32 %v1003, %v1004
    %v1006 = vrot.slane %v1005, 2
    %v1007 = vmax.f32 %v1005, %v1006
    %v1008 = vrot.slane %v1007, 1
    %v1009 = vmax.f32 %v1007, %v1008
    %v1010 = vmax.f32 %v970, %v972
    %v1011 = vrot.slane %v1010, 4
    %v1012 = vmax.f32 %v1010, %v1011
    %v1013 = vrot.slane %v1012, 2
    %v1014 = vmax.f32 %v1012, %v1013
    %v1015 = vrot.slane %v1014, 1
    %v1016 = vmax.f32 %v1014, %v1015
    %v1017 = vsel %vm446, %v971, -inf
    %v1018 = vsel %vm446, %v973, -inf
    %v1019 = vmax.f32 %v1017, %v1018
    %v1020 = vrot.slane %v1019, 4
    %v1021 = vmax.f32 %v1019, %v1020
    %v1022 = vrot.slane %v1021, 2
    %v1023 = vmax.f32 %v1021, %v1022
    %v1024 = vrot.slane %v1023, 1
    %v1025 = vmax.f32 %v1023, %v1024
    %v1026 = vmax.f32 %v974, %v976
    %v1027 = vrot.slane %v1026, 4
    %v1028 = vmax.f32 %v1026, %v1027
    %v1029 = vrot.slane %v1028, 2
    %v1030 = vmax.f32 %v1028, %v1029
    %v1031 = vrot.slane %v1030, 1
    %v1032 = vmax.f32 %v1030, %v1031
    %v1033 = vsel %vm446, %v975, -inf
    %v1034 = vsel %vm446, %v977, -inf
    %v1035 = vmax.f32 %v1033, %v1034
    %v1036 = vrot.slane %v1035, 4
    %v1037 = vmax.f32 %v1035, %v1036
    %v1038 = vrot.slane %v1037, 2
    %v1039 = vmax.f32 %v1037, %v1038
    %v1040 = vrot.slane %v1039, 1
    %v1041 = vmax.f32 %v1039, %v1040
    %v1042 = vadd.s32 %v91, 128
    %vm1043 = vcmp.lt.s32.totalorder %v958, 2
    %vm1044 = vcmp.lt.s32.totalorder %v91, 96
    %vm1045 = vcmp.lt.s32.totalorder %v1042, 96
    %vm1046 = vmand %vm1043, %vm1044
    %vm1047 = vmand %vm1043, %vm1045
    %vm1048 = vcmp.ge.s32.totalorder %v958, 2
    %vm1049 = vcmp.ge.s32.totalorder %v91, 96
    %vm1050 = vcmp.ge.s32.totalorder %v1042, 96
    %vm1051 = vmand %vm1048, %vm1049
    %vm1052 = vmand %vm1048, %vm1050
    %vm1053 = vmor %vm1046, %vm1051
    %vm1054 = vmor %vm1047, %vm1052
    %vm1063 = vcmask 1041409
    %v1064 = vsel %vm1063, %v1000, %v984
    %vm1065 = vcmask 1042434
    %v1066 = vsel %vm1065, %v1016, %v1064
    %vm1067 = vcmask 1043459
    %v1068 = vsel %vm1067, %v1032, %v1066
    %v1069 = vsel %vm1063, %v1009, %v993
    %v1070 = vsel %vm1065, %v1025, %v1069
    %v1071 = vsel %vm1067, %v1041, %v1070
    %v1074 = vsel %vm1053, %v1068, 0.0
    %v1075 = vsel %vm1054, %v1071, 0.0
    %v1076 = vld [vmem:[%s5] sm:$0xff]
    %v1077 = vld [vmem:[%s5 + $0x8] sm:$0xff]
    %v1078 = vld [vmem:[%s5 + $0x10] sm:$0xff]
    %v1079 = vld [vmem:[%s5 + $0x18] sm:$0xff]
    %v1080 = vld [vmem:[%s5 + $0x20] sm:$0xff]
    %v1081 = vld [vmem:[%s5 + $0x28] sm:$0xff]
    %v1082 = vld [vmem:[%s5 + $0x30] sm:$0xff]
    %v1083 = vld [vmem:[%s5 + $0x38] sm:$0xff]
    %v1084 = vld [vmem:[%s5 + $0x40] sm:$0xff]
    %v1085 = vld [vmem:[%s5 + $0x48] sm:$0xff]
    %v1086 = vld [vmem:[%s5 + $0x50] sm:$0xff]
    %v1087 = vld [vmem:[%s5 + $0x58] sm:$0xff]
    %v1088 = vld [vmem:[%s5 + $0x60] sm:$0xff]
    %v1089 = vld [vmem:[%s5 + $0x68] sm:$0xff]
    %v1090 = vld [vmem:[%s5 + $0x70] sm:$0xff]
    %v1091 = vld [vmem:[%s5 + $0x78] sm:$0xff]
    %v1092 = vld [vmem:[%s5 + $0x80] sm:$0xff]
    %v1093 = vld [vmem:[%s5 + $0x88] sm:$0xff]
    %v1094 = vld [vmem:[%s5 + $0x90] sm:$0xff]
    %v1095 = vld [vmem:[%s5 + $0x98] sm:$0xff]
    %v1096 = vld [vmem:[%s5 + $0xa0] sm:$0xff]
    %v1097 = vld [vmem:[%s5 + $0xa8] sm:$0xff]
    %v1098 = vld [vmem:[%s5 + $0xb0] sm:$0xff]
    %v1099 = vld [vmem:[%s5 + $0xb8] sm:$0xff]
    %v1101 = vsel %vm446, %v1075, 0
    %1103 = vmatpush.msra.mxu0 %v1091
    %1104 = vmatpush.msra.mxu0 %v1090
    %1105 = vmatpush.msra.mxu0 %v1089
    %1106 = vmatpush.msra.mxu0 %v1088
    %1107 = vmatpush.msra.mxu0 %v1087
    %1108 = vmatpush.msra.mxu0 %v1086
    %1109 = vmatpush.msra.mxu0 %v1085
    %1110 = vmatpush.msra.mxu0 %v1084
    %1111 = vmatpush.msra.mxu0 %v1083
    %1112 = vmatpush.msra.mxu0 %v1082
    %1113 = vmatpush.msra.mxu0 %v1081
    %1114 = vmatpush.msra.mxu0 %v1080
    %1115 = vmatpush.msra.mxu0 %v1079
    %1116 = vmatpush.msra.mxu0 %v1078
    %1117 = vmatpush.msra.mxu0 %v1077
    %1118 = vmatpush.msra.mxu0 %v1076
    %1119 = vmatmul.f32.gmra.mxu0 %v1074
    %v1120 = vpop.f32.mrf.mxu0
    %v1121 = vadd.f32 0.0, %v1120
    %1122 = vdwg.mxu0
    %1123 = vmatpush.msra.mxu0 0.0
    %1124 = vmatpush.msra.mxu0 0.0
    %1125 = vmatpush.msra.mxu0 0.0
    %1126 = vmatpush.msra.mxu0 0.0
    %1127 = vmatpush.msra.mxu0 0.0
    %1128 = vmatpush.msra.mxu0 0.0
    %1129 = vmatpush.msra.mxu0 0.0
    %1130 = vmatpush.msra.mxu0 0.0
    %1131 = vmatpush.msra.mxu0 %v1099
    %1132 = vmatpush.msra.mxu0 %v1098
    %1133 = vmatpush.msra.mxu0 %v1097
    %1134 = vmatpush.msra.mxu0 %v1096
    %1135 = vmatpush.msra.mxu0 %v1095
    %1136 = vmatpush.msra.mxu0 %v1094
    %1137 = vmatpush.msra.mxu0 %v1093
    %1138 = vmatpush.msra.mxu0 %v1092
    %1139 = vmatmul.f32.gmra.mxu0 %v1101
    %v1140 = vpop.f32.mrf.mxu0
    %v1141 = vadd.f32 %v1121, %v1140
    %1142 = vdwg.mxu0
    %v1144 = vrot.slane %v1141, 2
    %v1146 = vadd.f32 %v1141, %v1144
    %v1147 = vld [vmem:[%s6] sm:$0x1]
    %v1149 = vperm.slane %v1147, 0
    %v1151 = vadd.f32 %v1146, %v1149
    %v1152 = vmax.f32 %v1151, 0.0
    %v1153 = vld [vmem:[%s7] sm:$0xff]
    %v1154 = vld [vmem:[%s7 + $0x8] sm:$0xff]
    %v1155 = vld [vmem:[%s7 + $0x10] sm:$0xff]
    %v1156 = vld [vmem:[%s7 + $0x18] sm:$0xff]
    %v1157 = vld [vmem:[%s7 + $0x20] sm:$0xff]
    %v1158 = vld [vmem:[%s7 + $0x28] sm:$0xff]
    %v1159 = vld [vmem:[%s7 + $0x30] sm:$0xff]
    %v1160 = vld [vmem:[%s7 + $0x38] sm:$0xff]
    %v1161 = vld [vmem:[%s8] sm:$0x1]
    %v1163 = vperm.slane %v1161, 0
    %v1166 = vsel %vm446, %v1152, 0
    %1168 = vmatpush.msra.mxu0 0.0
    %1169 = vmatpush.msra.mxu0 0.0
    %1170 = vmatpush.msra.mxu0 0.0
    %1171 = vmatpush.msra.mxu0 0.0
    %1172 = vmatpush.msra.mxu0 0.0
    %1173 = vmatpush.msra.mxu0 0.0
    %1174 = vmatpush.msra.mxu0 0.0
    %1175 = vmatpush.msra.mxu0 0.0
    %1176 = vmatpush.msra.mxu0 %v1160
    %1177 = vmatpush.msra.mxu0 %v1159
    %1178 = vmatpush.msra.mxu0 %v1158
    %1179 = vmatpush.msra.mxu0 %v1157
    %1180 = vmatpush.msra.mxu0 %v1156
    %1181 = vmatpush.msra.mxu0 %v1155
    %1182 = vmatpush.msra.mxu0 %v1154
    %1183 = vmatpush.msra.mxu0 %v1153
    %1184 = vmatmul.f32.gmra.mxu0 %v1166
    %v1185 = vpop.f32.mrf.mxu0
    %v1186 = vadd.f32 %v1163, %v1185
    %1187 = vdwg.mxu0
    %1188 = vst [vmem:[#allocation2] sm:$0x3] %v1186
    // Predicated region
    $region38: #{ocr_cnn_forward.1} parent=1 // pred_check
      _
    $region39: #{ocr_cnn_forward.1} parent=1 // pred_check_branch
      %1190 = sbr.rel (0) target = $region41
    $region40: #{ocr_cnn_forward.1} parent=1 // pred_region
      %1192 = vsyncadd [#allocation3], 0
      %s1194 = sshll.u32 [#allocation2], 4
      %s1195 = int_to_ptr.vmem [resolvable:$true] %s1194
      %s1196 = sshll.u32 %s9, 4
      %s1197 = int_to_ptr.hbm [resolvable:$true] %s1196
      %1199 = dma.vmem_to_hbm [thread:$0]  %s1195, 32, %s1197, [#allocation3]
    $region41: #{ocr_cnn_forward.1} parent=1 // pred_fallthru
      _
    // Predicated region
    $region42: #{ocr_cnn_forward.1} parent=1 // pred_check
      _
    $region43: #{ocr_cnn_forward.1} parent=1 // pred_check_branch
      %1201 = sbr.rel (0) target = $region45
    $region44: #{ocr_cnn_forward.1} parent=1 // pred_region
      %1203 = dma.done [#allocation3], 32
    $region45: #{ocr_cnn_forward.1} parent=1 // pred_fallthru
      _
    %1204 = vsyncpa [#allocation3], 1

</llo_original>
